<compile_context>
chip_gen: v5e
topology: v5e:2x2
jax: 0.10.0
libtpu: 0.0.40
codegen_flags: <defaults>
</compile_context>

<pallas_src>
import math
from functools import partial

import jax
import jax.numpy as jnp
from jax.experimental import pallas as pl
from jax.experimental.pallas import tpu as pltpu


def _softplus_pt(x):
    # Matches torch.nn.Softplus(beta=1, threshold=20):
    #   x                 if x > 20
    #   log(1 + exp(x))   otherwise
    safe = jnp.where(x > 20.0, 0.0, x)
    return jnp.where(x > 20.0, x, jnp.log1p(jnp.exp(safe)))


def _mlp_kernel(*refs, num_linears, residual, matmul_dtype):
    """refs = (x_ref, w0, b0, w1, b1, ..., out_ref)."""
    x_ref = refs[0]
    out_ref = refs[-1]
    wb = refs[1:-1]
    assert len(wb) == 2 * num_linears

    h = x_ref[...]                          # f32 (bm, n_input), native width
    for i in range(num_linears):
        # Softplus sits before linears 1 .. num_linears-2 (not before the first
        # or the last).  Kept in f32: safe on v5e (no bf16 VPU/EUP) and free
        # filler under the MXU/DMA bottleneck elsewhere.
        if 1 <= i <= num_linears - 2:
            h = _softplus_pt(h)
        w = wb[2 * i][...]                  # already matmul_dtype (bf16 or f32)
        b = wb[2 * i + 1][...]              # f32 (1, fan_out), broadcasts
        h = jnp.dot(h.astype(matmul_dtype), w,
                    preferred_element_type=jnp.float32) + b

    if residual:
        # Re-read x at point of use: the tile is resident in VMEM, so this is
        # effectively free and avoids keeping a (bm, n_input) f32 value live
        # across the whole layer chain (vreg/VMEM pressure at large bm).
        h = h + x_ref[...]
    out_ref[...] = h.astype(out_ref.dtype)


def _cdiv(a, b):
    return -(-a // b)


def _round_up(n, m):
    return ((n + m - 1) // m) * m


def _pad2d(a, rows, cols):
    pr, pc = rows - a.shape[0], cols - a.shape[1]
    if pr or pc:
        a = jnp.pad(a, ((0, pr), (0, pc)))
    return a


def _vmem_capacity_bytes():
    try:
        return int(pltpu.get_tpu_info().vmem_capacity_bytes)
    except Exception:
        return 64 << 20  # conservative: v7x per-core VMEM


def mlp_forward(x, weights, biases, *, residual, block_m=1024,
                matmul_dtype=jnp.bfloat16):
    """x: (B, n_input) f32.  weights[i]: (in_i, out_i) f32.  biases[i]: (1, out_i) f32."""
    B, n_input = x.shape
    num_linears = len(weights)
    out_dim = weights[-1].shape[1]
    if residual:
        assert out_dim == n_input, "residual requires last_layer_dim == n_input"

    # ---- feature dims: streamed arrays stay native, hidden dims padded to 128 ----
    dims = [n_input] + [w.shape[1] for w in weights]
    dims_p = list(dims)
    for i in range(1, len(dims) - 1):       # interior (hidden) dims only
        dims_p[i] = _round_up(dims[i], 128)
    max_dim_p = max(dims_p)

    w_item = jnp.dtype(matmul_dtype).itemsize
    w_shapes = [(dims_p[i], dims_p[i + 1]) for i in range(num_linears)]
    resident_1x = (sum(r * c * w_item for r, c in w_shapes)        # weights
                   + sum(c * 4 for _, c in w_shapes))              # biases (f32)

    vmem_cap = _vmem_capacity_bytes()
    budget = int(0.75 * vmem_cap)

    def footprint(bm, weight_buffers):
        io = 2 * bm * n_input * 4 + 2 * bm * out_dim * 4   # double-buffered x / out
        act = 3 * bm * max_dim_p * 4                       # h (f32), bf16 cast copy, slack
        return weight_buffers * resident_1x + io + act

    # ---- batch tiling: even split, >=2 steps when possible, VMEM-clamped ----
    B16 = _round_up(B, 16)
    n_steps = _cdiv(B16, max(16, _round_up(block_m, 16)))
    if n_steps == 1 and B16 >= 64:
        n_steps = 2                         # use both TensorCores on v7x
    bm = _round_up(_cdiv(B16, n_steps), 16)
    while bm > 16 and footprint(bm, 1) > budget:
        new_bm = _round_up(max(16, bm // 2), 16)
        if new_bm == bm:
            break
        bm = new_bm
    Bp = _round_up(B16, bm)                 # at most bm-1 (< one tile) junk rows
    grid = (Bp // bm,)

    # ---- host-side padding / casting -------------------------------------------------
    x_p = _pad2d(x.astype(jnp.float32), Bp, n_input)
    w_p = [_pad2d(w, dims_p[i], dims_p[i + 1]).astype(matmul_dtype)
           for i, w in enumerate(weights)]
    b_p = [_pad2d(b, 1, dims_p[i + 1]).astype(jnp.float32)
           for i, b in enumerate(biases)]

    args = [x_p]
    for w, b in zip(w_p, b_p):
        args.append(w)
        args.append(b)

    # ---- advisory cost estimate (unpadded math) ---------------------------------------
    flops = 2 * B * sum(w.shape[0] * w.shape[1] for w in weights)
    transcendentals = 2 * B * sum(weights[i].shape[0]
                                  for i in range(1, num_linears - 1))
    bytes_accessed = 4 * (x.size + sum(w.size for w in weights)
                          + sum(b.size for b in biases) + B * out_dim)
    cost = pl.CostEstimate(flops=flops, transcendentals=transcendentals,
                           bytes_accessed=bytes_accessed)

    kernel = partial(_mlp_kernel, num_linears=num_linears,
                     residual=residual, matmul_dtype=matmul_dtype)

    def build(single_buffer_weights):
        in_specs = [pl.BlockSpec((bm, n_input), lambda i: (i, 0))]
        for w, b in zip(w_p, b_p):
            # Constant block index -> same weight block reused across grid steps
            # (no re-DMA).  Single-buffer it to halve resident VMEM when supported.
            if single_buffer_weights:
                in_specs.append(pl.BlockSpec(w.shape, lambda i: (0, 0),
                                             pipeline_mode=pl.Buffered(1)))
                in_specs.append(pl.BlockSpec(b.shape, lambda i: (0, 0),
                                             pipeline_mode=pl.Buffered(1)))
            else:
                in_specs.append(pl.BlockSpec(w.shape, lambda i: (0, 0)))
                in_specs.append(pl.BlockSpec(b.shape, lambda i: (0, 0)))
        out_spec = pl.BlockSpec((bm, out_dim), lambda i: (i, 0))

        need = footprint(bm, 1 if single_buffer_weights else 2)
        vmem_limit = int(min(budget, max(need + (4 << 20), 16 << 20)))

        return pl.pallas_call(
            kernel,
            out_shape=jax.ShapeDtypeStruct((Bp, out_dim), jnp.float32),
            grid_spec=pltpu.PrefetchScalarGridSpec(
                num_scalar_prefetch=0,
                grid=grid,
                in_specs=in_specs,
                out_specs=out_spec,
            ),
            compiler_params=pltpu.CompilerParams(
                dimension_semantics=("parallel",),
                vmem_limit_bytes=vmem_limit,
            ),
            cost_estimate=cost,
        )

    try:
        out_padded = build(single_buffer_weights=True)(*args)
    except Exception:
        # pl.Buffered(1) not accepted by this jax/Mosaic version -> fall back to
        # default double-buffering of the resident weights (correct, more VMEM).
        out_padded = build(single_buffer_weights=False)(*args)

    return out_padded[:B]


# ---------------- deterministic parameter construction (Xavier, as in module) -----------


def _xavier_uniform(key, fan_in, fan_out, gain=1.0):
    std = gain * math.sqrt(2.0 / float(fan_in + fan_out))
    a = math.sqrt(3.0) * std
    # stored as (fan_in, fan_out): transpose of PyTorch's (out, in) weight
    return jax.random.uniform(key, (fan_in, fan_out), jnp.float32, -a, a)


def _xavier_bias(key, fan_out, gain=1.0):
    # _xavier_override(bias, fan_out, fan_out): std = gain*sqrt(2/(2*fan_out))
    std = gain * math.sqrt(2.0 / float(fan_out + fan_out))
    a = math.sqrt(3.0) * std
    return jax.random.uniform(key, (1, fan_out), jnp.float32, -a, a)


def make_mlp_params(key, n_input, n_hidden, n_layers, last_layer_dim):
    """Linear dims exactly as createLinearLayers builds them."""
    dims = [(n_input, n_hidden)]
    for _ in range(n_layers - 2):
        dims.append((n_hidden, n_hidden))
    dims.append((n_hidden, last_layer_dim))

    weights, biases = [], []
    for (fi, fo) in dims:
        key, kw, kb = jax.random.split(key, 3)
        weights.append(_xavier_uniform(kw, fi, fo))
        biases.append(_xavier_bias(kb, fo))
    return weights, biases


# ---------------- pure-JAX reference for sanity check -----------------------------------


def mlp_reference(x, weights, biases, residual):
    num_linears = len(weights)
    h = x
    for i in range(num_linears):
        if 1 <= i <= num_linears - 2:
            h = _softplus_pt(h)
        h = h @ weights[i] + biases[i]
    return h + x if residual else h


if __name__ == "__main__":
    key = jax.random.PRNGKey(0)

    # --- Config 1: MlpModule(32, 64, 4, 32, nn.Softplus, residual=True), batch=16 ---
    batch, n_input, n_hidden, n_layers, last_layer_dim = 16, 32, 64, 4, 32
    residual = True
    key, kx, kp = jax.random.split(key, 3)
    # forward() flattens to (batch, -1); generate already-flat input like random_with_grad
    x = jax.random.normal(kx, (batch, n_input), jnp.float32)
    weights, biases = make_mlp_params(kp, n_input, n_hidden, n_layers, last_layer_dim)
    y_ref = mlp_reference(x, weights, biases, residual)

    # f32 matmul path: bit-faithful to the PyTorch module
    y_f32 = jax.block_until_ready(
        mlp_forward(x, weights, biases, residual=residual, matmul_dtype=jnp.float32))
    assert y_f32.shape == (batch, last_layer_dim)
    assert jnp.allclose(y_f32, y_ref, atol=1e-5, rtol=1e-5), "f32 path mismatch (cfg1)"

    # default bf16-weight / f32-accumulate MXU path (small expected drift vs f32 ref)
    y_bf16 = jax.block_until_ready(
        mlp_forward(x, weights, biases, residual=residual, matmul_dtype=jnp.bfloat16))
    assert y_bf16.shape == (batch, last_layer_dim)
    assert jnp.allclose(y_bf16, y_ref, atol=5e-2, rtol=5e-2), "bf16 path mismatch (cfg1)"

    # --- Config 2: multi-step grid (>=2 TCs on v7x), ragged batch, no residual ---
    batch2, n_input2, n_hidden2, n_layers2, out2 = 200, 24, 96, 3, 16
    key, kx2, kp2 = jax.random.split(key, 3)
    x2 = jax.random.normal(kx2, (batch2, n_input2), jnp.float32)
    w2, b2 = make_mlp_params(kp2, n_input2, n_hidden2, n_layers2, out2)
    y2_ref = mlp_reference(x2, w2, b2, residual=False)
    y2 = jax.block_until_ready(
        mlp_forward(x2, w2, b2, residual=False, block_m=64, matmul_dtype=jnp.float32))
    assert y2.shape == (batch2, out2)
    assert jnp.allclose(y2, y2_ref, atol=1e-4, rtol=1e-4), "f32 path mismatch (cfg2)"

    print("KERNEL_OK")
</pallas_src>

<mosaic_0001>
module attributes {stable_mosaic.version = 11 : i64} {
  func.func @_mlp_kernel(%arg0: i32, %arg1: memref<16x32xf32, #tpu.memory_space<vmem>>, %arg2: memref<32x128xf32, #tpu.memory_space<vmem>>, %arg3: memref<1x128xf32, #tpu.memory_space<vmem>>, %arg4: memref<128x128xf32, #tpu.memory_space<vmem>>, %arg5: memref<1x128xf32, #tpu.memory_space<vmem>>, %arg6: memref<128x128xf32, #tpu.memory_space<vmem>>, %arg7: memref<1x128xf32, #tpu.memory_space<vmem>>, %arg8: memref<128x32xf32, #tpu.memory_space<vmem>>, %arg9: memref<1x32xf32, #tpu.memory_space<vmem>>, %arg10: memref<16x32xf32, #tpu.memory_space<vmem>>) attributes {dimension_semantics = [#tpu.dimension_semantics<parallel>], iteration_bounds = array<i64: 1>, scalar_prefetch = 0 : i64, scratch_operands = 0 : i64, tpu.core_type = #tpu.core_type<tc>, window_params = [{transform_indices = @transform_0, window_bounds = array<i64: 16, 32>}, {pipeline_mode = #tpu.pipeline_mode<synchronous>, transform_indices = @transform_1, window_bounds = array<i64: 32, 128>}, {pipeline_mode = #tpu.pipeline_mode<synchronous>, transform_indices = @transform_2, window_bounds = array<i64: 1, 128>}, {pipeline_mode = #tpu.pipeline_mode<synchronous>, transform_indices = @transform_3, window_bounds = array<i64: 128, 128>}, {pipeline_mode = #tpu.pipeline_mode<synchronous>, transform_indices = @transform_4, window_bounds = array<i64: 1, 128>}, {pipeline_mode = #tpu.pipeline_mode<synchronous>, transform_indices = @transform_5, window_bounds = array<i64: 128, 128>}, {pipeline_mode = #tpu.pipeline_mode<synchronous>, transform_indices = @transform_6, window_bounds = array<i64: 1, 128>}, {pipeline_mode = #tpu.pipeline_mode<synchronous>, transform_indices = @transform_7, window_bounds = array<i64: 128, 32>}, {pipeline_mode = #tpu.pipeline_mode<synchronous>, transform_indices = @transform_8, window_bounds = array<i64: 1, 32>}, {transform_indices = @transform_9, window_bounds = array<i64: 16, 32>}]} {
    %c0 = arith.constant 0 : index
    %c0_0 = arith.constant 0 : index
    %0 = vector.load %arg1[%c0, %c0_0] : memref<16x32xf32, #tpu.memory_space<vmem>>, vector<16x32xf32>
    %c0_1 = arith.constant 0 : index
    %c0_2 = arith.constant 0 : index
    %1 = vector.load %arg2[%c0_1, %c0_2] : memref<32x128xf32, #tpu.memory_space<vmem>>, vector<32x128xf32>
    %c0_3 = arith.constant 0 : index
    %c0_4 = arith.constant 0 : index
    %2 = vector.load %arg3[%c0_3, %c0_4] : memref<1x128xf32, #tpu.memory_space<vmem>>, vector<1x128xf32>
    %cst = arith.constant dense<0.000000e+00> : vector<16x128xf32>
    %3 = tpu.matmul %0, %1, %cst {dimension_numbers = #tpu.dot_dimension_numbers<[1], [0], [0], [1], [0, 0, 1, 1], [], []>} : vector<16x32xf32>, vector<32x128xf32>, vector<16x128xf32> -> vector<16x128xf32>
    %4 = vector.broadcast %2 : vector<1x128xf32> to vector<16x128xf32>
    %5 = arith.addf %3, %4 : vector<16x128xf32>
    %cst_5 = arith.constant 2.000000e+01 : f32
    %6 = vector.broadcast %cst_5 : f32 to vector<16x128xf32>
    %7 = arith.cmpf ogt, %5, %6 : vector<16x128xf32>
    %cst_6 = arith.constant 0.000000e+00 : f32
    %8 = vector.broadcast %cst_6 : f32 to vector<16x128xf32>
    %9 = arith.select %7, %8, %5 : vector<16x128xi1>, vector<16x128xf32>
    %cst_7 = arith.constant 2.000000e+01 : f32
    %10 = vector.broadcast %cst_7 : f32 to vector<16x128xf32>
    %11 = arith.cmpf ogt, %5, %10 : vector<16x128xf32>
    %12 = math.exp %9 : vector<16x128xf32>
    %13 = math.log1p %12 : vector<16x128xf32>
    %14 = arith.select %11, %5, %13 : vector<16x128xi1>, vector<16x128xf32>
    %c0_8 = arith.constant 0 : index
    %c0_9 = arith.constant 0 : index
    %15 = vector.load %arg4[%c0_8, %c0_9] : memref<128x128xf32, #tpu.memory_space<vmem>>, vector<128x128xf32>
    %c0_10 = arith.constant 0 : index
    %c0_11 = arith.constant 0 : index
    %16 = vector.load %arg5[%c0_10, %c0_11] : memref<1x128xf32, #tpu.memory_space<vmem>>, vector<1x128xf32>
    %cst_12 = arith.constant dense<0.000000e+00> : vector<16x128xf32>
    %17 = tpu.matmul %14, %15, %cst_12 {dimension_numbers = #tpu.dot_dimension_numbers<[1], [0], [0], [1], [0, 0, 1, 1], [], []>} : vector<16x128xf32>, vector<128x128xf32>, vector<16x128xf32> -> vector<16x128xf32>
    %18 = vector.broadcast %16 : vector<1x128xf32> to vector<16x128xf32>
    %19 = arith.addf %17, %18 : vector<16x128xf32>
    %cst_13 = arith.constant 2.000000e+01 : f32
    %20 = vector.broadcast %cst_13 : f32 to vector<16x128xf32>
    %21 = arith.cmpf ogt, %19, %20 : vector<16x128xf32>
    %cst_14 = arith.constant 0.000000e+00 : f32
    %22 = vector.broadcast %cst_14 : f32 to vector<16x128xf32>
    %23 = arith.select %21, %22, %19 : vector<16x128xi1>, vector<16x128xf32>
    %cst_15 = arith.constant 2.000000e+01 : f32
    %24 = vector.broadcast %cst_15 : f32 to vector<16x128xf32>
    %25 = arith.cmpf ogt, %19, %24 : vector<16x128xf32>
    %26 = math.exp %23 : vector<16x128xf32>
    %27 = math.log1p %26 : vector<16x128xf32>
    %28 = arith.select %25, %19, %27 : vector<16x128xi1>, vector<16x128xf32>
    %c0_16 = arith.constant 0 : index
    %c0_17 = arith.constant 0 : index
    %29 = vector.load %arg6[%c0_16, %c0_17] : memref<128x128xf32, #tpu.memory_space<vmem>>, vector<128x128xf32>
    %c0_18 = arith.constant 0 : index
    %c0_19 = arith.constant 0 : index
    %30 = vector.load %arg7[%c0_18, %c0_19] : memref<1x128xf32, #tpu.memory_space<vmem>>, vector<1x128xf32>
    %cst_20 = arith.constant dense<0.000000e+00> : vector<16x128xf32>
    %31 = tpu.matmul %28, %29, %cst_20 {dimension_numbers = #tpu.dot_dimension_numbers<[1], [0], [0], [1], [0, 0, 1, 1], [], []>} : vector<16x128xf32>, vector<128x128xf32>, vector<16x128xf32> -> vector<16x128xf32>
    %32 = vector.broadcast %30 : vector<1x128xf32> to vector<16x128xf32>
    %33 = arith.addf %31, %32 : vector<16x128xf32>
    %c0_21 = arith.constant 0 : index
    %c0_22 = arith.constant 0 : index
    %34 = vector.load %arg8[%c0_21, %c0_22] : memref<128x32xf32, #tpu.memory_space<vmem>>, vector<128x32xf32>
    %c0_23 = arith.constant 0 : index
    %c0_24 = arith.constant 0 : index
    %35 = vector.load %arg9[%c0_23, %c0_24] : memref<1x32xf32, #tpu.memory_space<vmem>>, vector<1x32xf32>
    %cst_25 = arith.constant dense<0.000000e+00> : vector<16x32xf32>
    %36 = tpu.matmul %33, %34, %cst_25 {dimension_numbers = #tpu.dot_dimension_numbers<[1], [0], [0], [1], [0, 0, 1, 1], [], []>} : vector<16x128xf32>, vector<128x32xf32>, vector<16x32xf32> -> vector<16x32xf32>
    %37 = vector.broadcast %35 : vector<1x32xf32> to vector<16x32xf32>
    %38 = arith.addf %36, %37 : vector<16x32xf32>
    %c0_26 = arith.constant 0 : index
    %c0_27 = arith.constant 0 : index
    %39 = vector.load %arg1[%c0_26, %c0_27] : memref<16x32xf32, #tpu.memory_space<vmem>>, vector<16x32xf32>
    %40 = arith.addf %38, %39 : vector<16x32xf32>
    %c0_28 = arith.constant 0 : index
    %c0_29 = arith.constant 0 : index
    %41 = vector.load %arg10[%c0_28, %c0_29] : memref<16x32xf32, #tpu.memory_space<vmem>>, vector<16x32xf32>
    tpu.vector_store %arg10[%c0_28, %c0_29], %40 {strides = array<i32>} : memref<16x32xf32, #tpu.memory_space<vmem>>, vector<16x32xf32>,
    return
  }
  func.func @transform_0(%arg0: i32) -> (i32, i32) {
    %c0_i32 = arith.constant 0 : i32
    %c0_i32_0 = arith.constant 0 : i32
    return %arg0, %c0_i32 : i32, i32
  }
  func.func @transform_1(%arg0: i32) -> (i32, i32) {
    %c0_i32 = arith.constant 0 : i32
    %c0_i32_0 = arith.constant 0 : i32
    %c0_i32_1 = arith.constant 0 : i32
    return %c0_i32, %c0_i32_0 : i32, i32
  }
  func.func @transform_2(%arg0: i32) -> (i32, i32) {
    %c0_i32 = arith.constant 0 : i32
    %c0_i32_0 = arith.constant 0 : i32
    %c0_i32_1 = arith.constant 0 : i32
    return %c0_i32, %c0_i32_0 : i32, i32
  }
  func.func @transform_3(%arg0: i32) -> (i32, i32) {
    %c0_i32 = arith.constant 0 : i32
    %c0_i32_0 = arith.constant 0 : i32
    %c0_i32_1 = arith.constant 0 : i32
    return %c0_i32, %c0_i32_0 : i32, i32
  }
  func.func @transform_4(%arg0: i32) -> (i32, i32) {
    %c0_i32 = arith.constant 0 : i32
    %c0_i32_0 = arith.constant 0 : i32
    %c0_i32_1 = arith.constant 0 : i32
    return %c0_i32, %c0_i32_0 : i32, i32
  }
  func.func @transform_5(%arg0: i32) -> (i32, i32) {
    %c0_i32 = arith.constant 0 : i32
    %c0_i32_0 = arith.constant 0 : i32
    %c0_i32_1 = arith.constant 0 : i32
    return %c0_i32, %c0_i32_0 : i32, i32
  }
  func.func @transform_6(%arg0: i32) -> (i32, i32) {
    %c0_i32 = arith.constant 0 : i32
    %c0_i32_0 = arith.constant 0 : i32
    %c0_i32_1 = arith.constant 0 : i32
    return %c0_i32, %c0_i32_0 : i32, i32
  }
  func.func @transform_7(%arg0: i32) -> (i32, i32) {
    %c0_i32 = arith.constant 0 : i32
    %c0_i32_0 = arith.constant 0 : i32
    %c0_i32_1 = arith.constant 0 : i32
    return %c0_i32, %c0_i32_0 : i32, i32
  }
  func.func @transform_8(%arg0: i32) -> (i32, i32) {
    %c0_i32 = arith.constant 0 : i32
    %c0_i32_0 = arith.constant 0 : i32
    %c0_i32_1 = arith.constant 0 : i32
    return %c0_i32, %c0_i32_0 : i32, i32
  }
  func.func @transform_9(%arg0: i32) -> (i32, i32) {
    %c0_i32 = arith.constant 0 : i32
    %c0_i32_0 = arith.constant 0 : i32
    return %arg0, %c0_i32 : i32, i32
  }
}

module attributes {stable_mosaic.version = 11 : i64} {
  func.func @_mlp_kernel(%arg0: i32, %arg1: memref<16x32xf32, #tpu.memory_space<vmem>>, %arg2: memref<32x128xf32, #tpu.memory_space<vmem>>, %arg3: memref<1x128xf32, #tpu.memory_space<vmem>>, %arg4: memref<128x128xf32, #tpu.memory_space<vmem>>, %arg5: memref<1x128xf32, #tpu.memory_space<vmem>>, %arg6: memref<128x128xf32, #tpu.memory_space<vmem>>, %arg7: memref<1x128xf32, #tpu.memory_space<vmem>>, %arg8: memref<128x32xf32, #tpu.memory_space<vmem>>, %arg9: memref<1x32xf32, #tpu.memory_space<vmem>>, %arg10: memref<16x32xf32, #tpu.memory_space<vmem>>) attributes {dimension_semantics = [#tpu.dimension_semantics<parallel>], iteration_bounds = array<i64: 1>, scalar_prefetch = 0 : i64, scratch_operands = 0 : i64, tpu.core_type = #tpu.core_type<tc>, window_params = [{transform_indices = @transform_0, window_bounds = array<i64: 16, 32>}, {pipeline_mode = #tpu.pipeline_mode<synchronous>, transform_indices = @transform_1, window_bounds = array<i64: 32, 128>}, {pipeline_mode = #tpu.pipeline_mode<synchronous>, transform_indices = @transform_2, window_bounds = array<i64: 1, 128>}, {pipeline_mode = #tpu.pipeline_mode<synchronous>, transform_indices = @transform_3, window_bounds = array<i64: 128, 128>}, {pipeline_mode = #tpu.pipeline_mode<synchronous>, transform_indices = @transform_4, window_bounds = array<i64: 1, 128>}, {pipeline_mode = #tpu.pipeline_mode<synchronous>, transform_indices = @transform_5, window_bounds = array<i64: 128, 128>}, {pipeline_mode = #tpu.pipeline_mode<synchronous>, transform_indices = @transform_6, window_bounds = array<i64: 1, 128>}, {pipeline_mode = #tpu.pipeline_mode<synchronous>, transform_indices = @transform_7, window_bounds = array<i64: 128, 32>}, {pipeline_mode = #tpu.pipeline_mode<synchronous>, transform_indices = @transform_8, window_bounds = array<i64: 1, 32>}, {transform_indices = @transform_9, window_bounds = array<i64: 16, 32>}]} {
    %c0 = arith.constant 0 : index
    %c0_0 = arith.constant 0 : index
    %0 = vector.load %arg1[%c0, %c0_0] : memref<16x32xf32, #tpu.memory_space<vmem>>, vector<16x32xf32>
    %c0_1 = arith.constant 0 : index
    %c0_2 = arith.constant 0 : index
    %1 = vector.load %arg2[%c0_1, %c0_2] : memref<32x128xf32, #tpu.memory_space<vmem>>, vector<32x128xf32>
    %c0_3 = arith.constant 0 : index
    %c0_4 = arith.constant 0 : index
    %2 = vector.load %arg3[%c0_3, %c0_4] : memref<1x128xf32, #tpu.memory_space<vmem>>, vector<1x128xf32>
    %cst = arith.constant dense<0.000000e+00> : vector<16x128xf32>
    %3 = tpu.matmul %0, %1, %cst {dimension_numbers = #tpu.dot_dimension_numbers<[1], [0], [0], [1], [0, 0, 1, 1], [], []>} : vector<16x32xf32>, vector<32x128xf32>, vector<16x128xf32> -> vector<16x128xf32>
    %4 = vector.broadcast %2 : vector<1x128xf32> to vector<16x128xf32>
    %5 = arith.addf %3, %4 : vector<16x128xf32>
    %cst_5 = arith.constant 2.000000e+01 : f32
    %6 = vector.broadcast %cst_5 : f32 to vector<16x128xf32>
    %7 = arith.cmpf ogt, %5, %6 : vector<16x128xf32>
    %cst_6 = arith.constant 0.000000e+00 : f32
    %8 = vector.broadcast %cst_6 : f32 to vector<16x128xf32>
    %9 = arith.select %7, %8, %5 : vector<16x128xi1>, vector<16x128xf32>
    %cst_7 = arith.constant 2.000000e+01 : f32
    %10 = vector.broadcast %cst_7 : f32 to vector<16x128xf32>
    %11 = arith.cmpf ogt, %5, %10 : vector<16x128xf32>
    %12 = math.exp %9 : vector<16x128xf32>
    %13 = math.log1p %12 : vector<16x128xf32>
    %14 = arith.select %11, %5, %13 : vector<16x128xi1>, vector<16x128xf32>
    %c0_8 = arith.constant 0 : index
    %c0_9 = arith.constant 0 : index
    %15 = vector.load %arg4[%c0_8, %c0_9] : memref<128x128xf32, #tpu.memory_space<vmem>>, vector<128x128xf32>
    %c0_10 = arith.constant 0 : index
    %c0_11 = arith.constant 0 : index
    %16 = vector.load %arg5[%c0_10, %c0_11] : memref<1x128xf32, #tpu.memory_space<vmem>>, vector<1x128xf32>
    %cst_12 = arith.constant dense<0.000000e+00> : vector<16x128xf32>
    %17 = tpu.matmul %14, %15, %cst_12 {dimension_numbers = #tpu.dot_dimension_numbers<[1], [0], [0], [1], [0, 0, 1, 1], [], []>} : vector<16x128xf32>, vector<128x128xf32>, vector<16x128xf32> -> vector<16x128xf32>
    %18 = vector.broadcast %16 : vector<1x128xf32> to vector<16x128xf32>
    %19 = arith.addf %17, %18 : vector<16x128xf32>
    %cst_13 = arith.constant 2.000000e+01 : f32
    %20 = vector.broadcast %cst_13 : f32 to vector<16x128xf32>
    %21 = arith.cmpf ogt, %19, %20 : vector<16x128xf32>
    %cst_14 = arith.constant 0.000000e+00 : f32
    %22 = vector.broadcast %cst_14 : f32 to vector<16x128xf32>
    %23 = arith.select %21, %22, %19 : vector<16x128xi1>, vector<16x128xf32>
    %cst_15 = arith.constant 2.000000e+01 : f32
    %24 = vector.broadcast %cst_15 : f32 to vector<16x128xf32>
    %25 = arith.cmpf ogt, %19, %24 : vector<16x128xf32>
    %26 = math.exp %23 : vector<16x128xf32>
    %27 = math.log1p %26 : vector<16x128xf32>
    %28 = arith.select %25, %19, %27 : vector<16x128xi1>, vector<16x128xf32>
    %c0_16 = arith.constant 0 : index
    %c0_17 = arith.constant 0 : index
    %29 = vector.load %arg6[%c0_16, %c0_17] : memref<128x128xf32, #tpu.memory_space<vmem>>, vector<128x128xf32>
    %c0_18 = arith.constant 0 : index
    %c0_19 = arith.constant 0 : index
    %30 = vector.load %arg7[%c0_18, %c0_19] : memref<1x128xf32, #tpu.memory_space<vmem>>, vector<1x128xf32>
    %cst_20 = arith.constant dense<0.000000e+00> : vector<16x128xf32>
    %31 = tpu.matmul %28, %29, %cst_20 {dimension_numbers = #tpu.dot_dimension_numbers<[1], [0], [0], [1], [0, 0, 1, 1], [], []>} : vector<16x128xf32>, vector<128x128xf32>, vector<16x128xf32> -> vector<16x128xf32>
    %32 = vector.broadcast %30 : vector<1x128xf32> to vector<16x128xf32>
    %33 = arith.addf %31, %32 : vector<16x128xf32>
    %c0_21 = arith.constant 0 : index
    %c0_22 = arith.constant 0 : index
    %34 = vector.load %arg8[%c0_21, %c0_22] : memref<128x32xf32, #tpu.memory_space<vmem>>, vector<128x32xf32>
    %c0_23 = arith.constant 0 : index
    %c0_24 = arith.constant 0 : index
    %35 = vector.load %arg9[%c0_23, %c0_24] : memref<1x32xf32, #tpu.memory_space<vmem>>, vector<1x32xf32>
    %cst_25 = arith.constant dense<0.000000e+00> : vector<16x32xf32>
    %36 = tpu.matmul %33, %34, %cst_25 {dimension_numbers = #tpu.dot_dimension_numbers<[1], [0], [0], [1], [0, 0, 1, 1], [], []>} : vector<16x128xf32>, vector<128x32xf32>, vector<16x32xf32> -> vector<16x32xf32>
    %37 = vector.broadcast %35 : vector<1x32xf32> to vector<16x32xf32>
    %38 = arith.addf %36, %37 : vector<16x32xf32>
    %c0_26 = arith.constant 0 : index
    %c0_27 = arith.constant 0 : index
    %39 = vector.load %arg1[%c0_26, %c0_27] : memref<16x32xf32, #tpu.memory_space<vmem>>, vector<16x32xf32>
    %40 = arith.addf %38, %39 : vector<16x32xf32>
    %c0_28 = arith.constant 0 : index
    %c0_29 = arith.constant 0 : index
    %41 = vector.load %arg10[%c0_28, %c0_29] : memref<16x32xf32, #tpu.memory_space<vmem>>, vector<16x32xf32>
    tpu.vector_store %arg10[%c0_28, %c0_29], %40 {strides = array<i32>} : memref<16x32xf32, #tpu.memory_space<vmem>>, vector<16x32xf32>,
    return
  }
  func.func @transform_0(%arg0: i32) -> (i32, i32) {
    %c0_i32 = arith.constant 0 : i32
    %c0_i32_0 = arith.constant 0 : i32
    return %arg0, %c0_i32 : i32, i32
  }
  func.func @transform_1(%arg0: i32) -> (i32, i32) {
    %c0_i32 = arith.constant 0 : i32
    %c0_i32_0 = arith.constant 0 : i32
    %c0_i32_1 = arith.constant 0 : i32
    return %c0_i32, %c0_i32_0 : i32, i32
  }
  func.func @transform_2(%arg0: i32) -> (i32, i32) {
    %c0_i32 = arith.constant 0 : i32
    %c0_i32_0 = arith.constant 0 : i32
    %c0_i32_1 = arith.constant 0 : i32
    return %c0_i32, %c0_i32_0 : i32, i32
  }
  func.func @transform_3(%arg0: i32) -> (i32, i32) {
    %c0_i32 = arith.constant 0 : i32
    %c0_i32_0 = arith.constant 0 : i32
    %c0_i32_1 = arith.constant 0 : i32
    return %c0_i32, %c0_i32_0 : i32, i32
  }
  func.func @transform_4(%arg0: i32) -> (i32, i32) {
    %c0_i32 = arith.constant 0 : i32
    %c0_i32_0 = arith.constant 0 : i32
    %c0_i32_1 = arith.constant 0 : i32
    return %c0_i32, %c0_i32_0 : i32, i32
  }
  func.func @transform_5(%arg0: i32) -> (i32, i32) {
    %c0_i32 = arith.constant 0 : i32
    %c0_i32_0 = arith.constant 0 : i32
    %c0_i32_1 = arith.constant 0 : i32
    return %c0_i32, %c0_i32_0 : i32, i32
  }
  func.func @transform_6(%arg0: i32) -> (i32, i32) {
    %c0_i32 = arith.constant 0 : i32
    %c0_i32_0 = arith.constant 0 : i32
    %c0_i32_1 = arith.constant 0 : i32
    return %c0_i32, %c0_i32_0 : i32, i32
  }
  func.func @transform_7(%arg0: i32) -> (i32, i32) {
    %c0_i32 = arith.constant 0 : i32
    %c0_i32_0 = arith.constant 0 : i32
    %c0_i32_1 = arith.constant 0 : i32
    return %c0_i32, %c0_i32_0 : i32, i32
  }
  func.func @transform_8(%arg0: i32) -> (i32, i32) {
    %c0_i32 = arith.constant 0 : i32
    %c0_i32_0 = arith.constant 0 : i32
    %c0_i32_1 = arith.constant 0 : i32
    return %c0_i32, %c0_i32_0 : i32, i32
  }
  func.func @transform_9(%arg0: i32) -> (i32, i32) {
    %c0_i32 = arith.constant 0 : i32
    %c0_i32_0 = arith.constant 0 : i32
    return %arg0, %c0_i32 : i32, i32
  }
}

</mosaic_0001>

<llo_original>
// kernel: tpu_custom_call.1
$region0: #{tpu_custom_call.1}
  #allocation0 [shape = 'u32[]', space=smem, size = 0x4, offset = 0x4, fixed_abs, tag = 'smem constant byte address 0x4 - core index']
  #allocation1 [shape = 'u32[72,128]{1,0:T(1,128)}', space=vmem, size = 0x9000, scoped, tag = 'internal scratch']
  %s0 = inlined_call_operand.hbm [shape: f32[16,32], index: 0, kind: input, shape index: {}]
  %s1 = inlined_call_operand.vmem [shape: f32[32,128], index: 1, kind: input, shape index: {}]
  %s2 = inlined_call_operand.vmem [shape: f32[1,128], index: 2, kind: input, shape index: {}]
  %s3 = inlined_call_operand.vmem [shape: f32[128,128], index: 3, kind: input, shape index: {}]
  %s4 = inlined_call_operand.vmem [shape: f32[1,128], index: 4, kind: input, shape index: {}]
  %s5 = inlined_call_operand.hbm [shape: f32[128,128], index: 5, kind: input, shape index: {}]
  %s6 = inlined_call_operand.vmem [shape: f32[1,128], index: 6, kind: input, shape index: {}]
  %s7 = inlined_call_operand.vmem [shape: f32[128,32], index: 7, kind: input, shape index: {}]
  %s8 = inlined_call_operand.vmem [shape: f32[1,32], index: 8, kind: input, shape index: {}]
  %s9 = inlined_call_operand.hbm [shape: f32[16,32], index: 9, kind: output, shape index: {}]
  %s10 = sld [smem:[#allocation0]]
  $region54: #{tpu_custom_call.1} parent=0
    _
  %s12 = ssub.s32 1, %s10
  %s13 = scalar_select 0, %s12, %s10
  $region1: #{tpu_custom_call.1} parent=0
    #allocation2 [shape = 'u8[8192]{0}', space=vmem, size = 0x2000, scoped, tag = 'input window, operand 0, single buffered']
    #allocation3 [shape = 's32[1]{0}', space=sflag, size = 0x4, scoped, tag = 'scoped memory for tpu_custom_call.1']
    #allocation4 [shape = 's32[1]{0}', space=sflag, size = 0x4, scoped, tag = 'scoped memory for tpu_custom_call.1']
    #allocation5 [shape = 'u8[65536]{0}', space=vmem, size = 0x10000, scoped, tag = 'input window, operand 5, single buffered']
    #allocation6 [shape = 's32[1]{0}', space=sflag, size = 0x4, scoped, tag = 'scoped memory for tpu_custom_call.1']
    #allocation7 [shape = 'u8[8192]{0}', space=vmem, size = 0x2000, scoped, tag = 'output window, operand 0, single buffered']
    %14 = vsyncpa [#allocation3], 0
    %15 = vsyncpa [#allocation6], 0
    %16 = vsyncpa [#allocation4], 0
    // Predicated region
    $region2: #{tpu_custom_call.1} parent=1 // pred_check
      _
    $region3: #{tpu_custom_call.1} parent=1 // pred_check_branch
      %18 = sbr.rel (0) target = $region5
    $region4: #{tpu_custom_call.1} parent=1 // pred_region
      %20 = vsyncadd [#allocation3], 0
      %s21 = sshll.u32 %s0, 4
      %s22 = int_to_ptr.hbm [resolvable:$true] %s21
      %s23 = sshll.u32 [#allocation2], 4
      %s24 = int_to_ptr.vmem [resolvable:$true] %s23
      %29 = dma.hbm_to_vmem [thread:$0]  %s22, 256, %s24, [#allocation3], 128, 128, 8
    $region5: #{tpu_custom_call.1} parent=1 // pred_fallthru
      _
    // Predicated region
    $region6: #{tpu_custom_call.1} parent=1 // pred_check
      _
    $region7: #{tpu_custom_call.1} parent=1 // pred_check_branch
      %31 = sbr.rel (0) target = $region9
    $region8: #{tpu_custom_call.1} parent=1 // pred_region
      _
    $region9: #{tpu_custom_call.1} parent=1 // pred_fallthru
      _
    // Predicated region
    $region10: #{tpu_custom_call.1} parent=1 // pred_check
      _
    $region11: #{tpu_custom_call.1} parent=1 // pred_check_branch
      %33 = sbr.rel (0) target = $region13
    $region12: #{tpu_custom_call.1} parent=1 // pred_region
      _
    $region13: #{tpu_custom_call.1} parent=1 // pred_fallthru
      _
    // Predicated region
    $region14: #{tpu_custom_call.1} parent=1 // pred_check
      _
    $region15: #{tpu_custom_call.1} parent=1 // pred_check_branch
      %35 = sbr.rel (0) target = $region17
    $region16: #{tpu_custom_call.1} parent=1 // pred_region
      _
    $region17: #{tpu_custom_call.1} parent=1 // pred_fallthru
      _
    // Predicated region
    $region18: #{tpu_custom_call.1} parent=1 // pred_check
      _
    $region19: #{tpu_custom_call.1} parent=1 // pred_check_branch
      %37 = sbr.rel (0) target = $region21
    $region20: #{tpu_custom_call.1} parent=1 // pred_region
      _
    $region21: #{tpu_custom_call.1} parent=1 // pred_fallthru
      _
    // Predicated region
    $region22: #{tpu_custom_call.1} parent=1 // pred_check
      _
    $region23: #{tpu_custom_call.1} parent=1 // pred_check_branch
      %39 = sbr.rel (0) target = $region25
    $region24: #{tpu_custom_call.1} parent=1 // pred_region
      %41 = vsyncadd [#allocation6], 0
      %s42 = sshll.u32 %s5, 4
      %s43 = int_to_ptr.hbm [resolvable:$true] %s42
      %s44 = sshll.u32 [#allocation5], 4
      %s45 = int_to_ptr.vmem [resolvable:$true] %s44
      %50 = dma.hbm_to_vmem [thread:$0]  %s43, 2048, %s45, [#allocation6], 128, 128, 8
    $region25: #{tpu_custom_call.1} parent=1 // pred_fallthru
      _
    // Predicated region
    $region26: #{tpu_custom_call.1} parent=1 // pred_check
      _
    $region27: #{tpu_custom_call.1} parent=1 // pred_check_branch
      %52 = sbr.rel (0) target = $region29
    $region28: #{tpu_custom_call.1} parent=1 // pred_region
      _
    $region29: #{tpu_custom_call.1} parent=1 // pred_fallthru
      _
    // Predicated region
    $region30: #{tpu_custom_call.1} parent=1 // pred_check
      _
    $region31: #{tpu_custom_call.1} parent=1 // pred_check_branch
      %54 = sbr.rel (0) target = $region33
    $region32: #{tpu_custom_call.1} parent=1 // pred_region
      _
    $region33: #{tpu_custom_call.1} parent=1 // pred_fallthru
      _
    // Predicated region
    $region34: #{tpu_custom_call.1} parent=1 // pred_check
      _
    $region35: #{tpu_custom_call.1} parent=1 // pred_check_branch
      %56 = sbr.rel (0) target = $region37
    $region36: #{tpu_custom_call.1} parent=1 // pred_region
      _
    $region37: #{tpu_custom_call.1} parent=1 // pred_fallthru
      _
    // Predicated region
    $region38: #{tpu_custom_call.1} parent=1 // pred_check
      _
    $region39: #{tpu_custom_call.1} parent=1 // pred_check_branch
      %58 = sbr.rel (0) target = $region41
    $region40: #{tpu_custom_call.1} parent=1 // pred_region
      %60 = dma.done [#allocation3], 256
    $region41: #{tpu_custom_call.1} parent=1 // pred_fallthru
      _
    // Predicated region
    $region42: #{tpu_custom_call.1} parent=1 // pred_check
      _
    $region43: #{tpu_custom_call.1} parent=1 // pred_check_branch
      %62 = sbr.rel (0) target = $region45
    $region44: #{tpu_custom_call.1} parent=1 // pred_region
      %64 = dma.done [#allocation6], 2048
    $region45: #{tpu_custom_call.1} parent=1 // pred_fallthru
      _
    %v65 = vld [vmem:[#allocation2] sm:$0xff]
    %v66 = vld [vmem:[#allocation2 + $0x8] sm:$0xff]
    %v67 = vld [vmem:[%s1] sm:$0xff]
    %v68 = vld [vmem:[%s1 + $0x8] sm:$0xff]
    %v69 = vld [vmem:[%s1 + $0x10] sm:$0xff]
    %v70 = vld [vmem:[%s1 + $0x18] sm:$0xff]
    %v71 = vld [vmem:[%s2] sm:$0x1]
    %v73 = vperm.slane %v71, 0
    %vm75 = vcmask 261120
    %v77 = vsel %vm75, %v65, 0
    %v80 = vsel %vm75, %v66, 0
    %82 = vmatpush.msra.mxu0 0.0
    %83 = vmatpush.msra.mxu0 0.0
    %84 = vmatpush.msra.mxu0 0.0
    %85 = vmatpush.msra.mxu0 0.0
    %86 = vmatpush.msra.mxu0 0.0
    %87 = vmatpush.msra.mxu0 0.0
    %88 = vmatpush.msra.mxu0 0.0
    %89 = vmatpush.msra.mxu0 0.0
    %90 = vmatpush.msra.mxu0 0.0
    %91 = vmatpush.msra.mxu0 0.0
    %92 = vmatpush.msra.mxu0 0.0
    %93 = vmatpush.msra.mxu0 0.0
    %94 = vmatpush.msra.mxu0 %v70
    %95 = vmatpush.msra.mxu0 %v69
    %96 = vmatpush.msra.mxu0 %v68
    %97 = vmatpush.msra.mxu0 %v67
    %98 = vmatmul.f32.gmra.mxu0 %v77
    %v99 = vpop.f32.mrf.mxu0
    %v100 = vadd.f32 %v73, %v99
    %101 = vmatmul.f32.gmra.mxu0 %v80
    %v102 = vpop.f32.mrf.mxu0
    %v103 = vadd.f32 %v73, %v102
    %104 = vdwg.mxu0
    %vm105 = vcmp.gt.f32.partialorder %v100, 20.0
    %vm106 = vcmp.gt.f32.partialorder %v103, 20.0
    %v107 = vsel %vm105, 0.0, %v100
    %v108 = vsel %vm106, 0.0, %v103
    %v109 = vmul.f32 %v107, 1.442695
    %v110 = vpow.pop %v109
    %v111 = vmul.f32 %v108, 1.442695
    %v112 = vpow.pop %v111
    %v113 = vadd.f32 %v110, 1.0
    %v114 = vlog2.pop %v113
    %v115 = vmul.f32 %v114, 0.6931472
    %v116 = vmul.f32 -0.5, %v110
    %v117 = vadd.f32 %v116, 1.0
    %v118 = vmul.f32 %v117, %v110
    %v119 = vand.u32 2147483647, %v110
    %vm120 = vcmp.lt.f32.partialorder %v119, 0.0004427343
    %v121 = vsel %vm120, %v118, %v115
    %v122 = vadd.f32 %v112, 1.0
    %v123 = vlog2.pop %v122
    %v124 = vmul.f32 %v123, 0.6931472
    %v125 = vmul.f32 -0.5, %v112
    %v126 = vadd.f32 %v125, 1.0
    %v127 = vmul.f32 %v126, %v112
    %v128 = vand.u32 2147483647, %v112
    %vm129 = vcmp.lt.f32.partialorder %v128, 0.0004427343
    %v130 = vsel %vm129, %v127, %v124
    %v131 = vsel %vm105, %v100, %v121
    %v132 = vsel %vm106, %v103, %v130
    %v133 = vld [vmem:[%s3] sm:$0xff]
    %v134 = vld [vmem:[%s3 + $0x8] sm:$0xff]
    %v135 = vld [vmem:[%s3 + $0x10] sm:$0xff]
    %v136 = vld [vmem:[%s3 + $0x18] sm:$0xff]
    %v137 = vld [vmem:[%s3 + $0x20] sm:$0xff]
    %v138 = vld [vmem:[%s3 + $0x28] sm:$0xff]
    %v139 = vld [vmem:[%s3 + $0x30] sm:$0xff]
    %v140 = vld [vmem:[%s3 + $0x38] sm:$0xff]
    %v141 = vld [vmem:[%s3 + $0x40] sm:$0xff]
    %v142 = vld [vmem:[%s3 + $0x48] sm:$0xff]
    %v143 = vld [vmem:[%s3 + $0x50] sm:$0xff]
    %v144 = vld [vmem:[%s3 + $0x58] sm:$0xff]
    %v145 = vld [vmem:[%s3 + $0x60] sm:$0xff]
    %v146 = vld [vmem:[%s3 + $0x68] sm:$0xff]
    %v147 = vld [vmem:[%s3 + $0x70] sm:$0xff]
    %v148 = vld [vmem:[%s3 + $0x78] sm:$0xff]
    %v149 = vld [vmem:[%s4] sm:$0x1]
    %v151 = vperm.slane %v149, 0
    %153 = vmatpush.msra.mxu0 %v148
    %154 = vmatpush.msra.mxu0 %v147
    %155 = vmatpush.msra.mxu0 %v146
    %156 = vmatpush.msra.mxu0 %v145
    %157 = vmatpush.msra.mxu0 %v144
    %158 = vmatpush.msra.mxu0 %v143
    %159 = vmatpush.msra.mxu0 %v142
    %160 = vmatpush.msra.mxu0 %v141
    %161 = vmatpush.msra.mxu0 %v140
    %162 = vmatpush.msra.mxu0 %v139
    %163 = vmatpush.msra.mxu0 %v138
    %164 = vmatpush.msra.mxu0 %v137
    %165 = vmatpush.msra.mxu0 %v136
    %166 = vmatpush.msra.mxu0 %v135
    %167 = vmatpush.msra.mxu0 %v134
    %168 = vmatpush.msra.mxu0 %v133
    %169 = vmatmul.f32.gmra.mxu0 %v131
    %v170 = vpop.f32.mrf.mxu0
    %v171 = vadd.f32 %v151, %v170
    %172 = vmatmul.f32.gmra.mxu0 %v132
    %v173 = vpop.f32.mrf.mxu0
    %v174 = vadd.f32 %v151, %v173
    %175 = vdwg.mxu0
    %vm176 = vcmp.gt.f32.partialorder %v171, 20.0
    %vm177 = vcmp.gt.f32.partialorder %v174, 20.0
    %v178 = vsel %vm176, 0.0, %v171
    %v179 = vsel %vm177, 0.0, %v174
    %v180 = vmul.f32 %v178, 1.442695
    %v181 = vpow.pop %v180
    %v182 = vmul.f32 %v179, 1.442695
    %v183 = vpow.pop %v182
    %v184 = vadd.f32 %v181, 1.0
    %v185 = vlog2.pop %v184
    %v186 = vmul.f32 %v185, 0.6931472
    %v187 = vmul.f32 -0.5, %v181
    %v188 = vadd.f32 %v187, 1.0
    %v189 = vmul.f32 %v188, %v181
    %v190 = vand.u32 2147483647, %v181
    %vm191 = vcmp.lt.f32.partialorder %v190, 0.0004427343
    %v192 = vsel %vm191, %v189, %v186
    %v193 = vadd.f32 %v183, 1.0
    %v194 = vlog2.pop %v193
    %v195 = vmul.f32 %v194, 0.6931472
    %v196 = vmul.f32 -0.5, %v183
    %v197 = vadd.f32 %v196, 1.0
    %v198 = vmul.f32 %v197, %v183
    %v199 = vand.u32 2147483647, %v183
    %vm200 = vcmp.lt.f32.partialorder %v199, 0.0004427343
    %v201 = vsel %vm200, %v198, %v195
    %v202 = vsel %vm176, %v171, %v192
    %v203 = vsel %vm177, %v174, %v201
    %v204 = vld [vmem:[#allocation5] sm:$0xff]
    %v205 = vld [vmem:[#allocation5 + $0x8] sm:$0xff]
    %v206 = vld [vmem:[#allocation5 + $0x10] sm:$0xff]
    %v207 = vld [vmem:[#allocation5 + $0x18] sm:$0xff]
    %v208 = vld [vmem:[#allocation5 + $0x20] sm:$0xff]
    %v209 = vld [vmem:[#allocation5 + $0x28] sm:$0xff]
    %v210 = vld [vmem:[#allocation5 + $0x30] sm:$0xff]
    %v211 = vld [vmem:[#allocation5 + $0x38] sm:$0xff]
    %v212 = vld [vmem:[#allocation5 + $0x40] sm:$0xff]
    %v213 = vld [vmem:[#allocation5 + $0x48] sm:$0xff]
    %v214 = vld [vmem:[#allocation5 + $0x50] sm:$0xff]
    %v215 = vld [vmem:[#allocation5 + $0x58] sm:$0xff]
    %v216 = vld [vmem:[#allocation5 + $0x60] sm:$0xff]
    %v217 = vld [vmem:[#allocation5 + $0x68] sm:$0xff]
    %v218 = vld [vmem:[#allocation5 + $0x70] sm:$0xff]
    %v219 = vld [vmem:[#allocation5 + $0x78] sm:$0xff]
    %v220 = vld [vmem:[%s6] sm:$0x1]
    %v222 = vperm.slane %v220, 0
    %224 = vmatpush.msra.mxu0 %v219
    %225 = vmatpush.msra.mxu0 %v218
    %226 = vmatpush.msra.mxu0 %v217
    %227 = vmatpush.msra.mxu0 %v216
    %228 = vmatpush.msra.mxu0 %v215
    %229 = vmatpush.msra.mxu0 %v214
    %230 = vmatpush.msra.mxu0 %v213
    %231 = vmatpush.msra.mxu0 %v212
    %232 = vmatpush.msra.mxu0 %v211
    %233 = vmatpush.msra.mxu0 %v210
    %234 = vmatpush.msra.mxu0 %v209
    %235 = vmatpush.msra.mxu0 %v208
    %236 = vmatpush.msra.mxu0 %v207
    %237 = vmatpush.msra.mxu0 %v206
    %238 = vmatpush.msra.mxu0 %v205
    %239 = vmatpush.msra.mxu0 %v204
    %240 = vmatmul.f32.gmra.mxu0 %v202
    %v241 = vpop.f32.mrf.mxu0
    %v242 = vadd.f32 %v222, %v241
    %243 = vmatmul.f32.gmra.mxu0 %v203
    %v244 = vpop.f32.mrf.mxu0
    %v245 = vadd.f32 %v222, %v244
    %246 = vdwg.mxu0
    %v247 = vld [vmem:[%s7] sm:$0xff]
    %v248 = vld [vmem:[%s7 + $0x8] sm:$0xff]
    %v249 = vld [vmem:[%s7 + $0x10] sm:$0xff]
    %v250 = vld [vmem:[%s7 + $0x18] sm:$0xff]
    %v251 = vld [vmem:[%s7 + $0x20] sm:$0xff]
    %v252 = vld [vmem:[%s7 + $0x28] sm:$0xff]
    %v253 = vld [vmem:[%s7 + $0x30] sm:$0xff]
    %v254 = vld [vmem:[%s7 + $0x38] sm:$0xff]
    %v255 = vld [vmem:[%s7 + $0x40] sm:$0xff]
    %v256 = vld [vmem:[%s7 + $0x48] sm:$0xff]
    %v257 = vld [vmem:[%s7 + $0x50] sm:$0xff]
    %v258 = vld [vmem:[%s7 + $0x58] sm:$0xff]
    %v259 = vld [vmem:[%s7 + $0x60] sm:$0xff]
    %v260 = vld [vmem:[%s7 + $0x68] sm:$0xff]
    %v261 = vld [vmem:[%s7 + $0x70] sm:$0xff]
    %v262 = vld [vmem:[%s7 + $0x78] sm:$0xff]
    %v263 = vld [vmem:[%s8] sm:$0x1]
    %v265 = vperm.slane %v263, 0
    %267 = vmatpush.msra.mxu0 %v262
    %268 = vmatpush.msra.mxu0 %v261
    %269 = vmatpush.msra.mxu0 %v260
    %270 = vmatpush.msra.mxu0 %v259
    %271 = vmatpush.msra.mxu0 %v258
    %272 = vmatpush.msra.mxu0 %v257
    %273 = vmatpush.msra.mxu0 %v256
    %274 = vmatpush.msra.mxu0 %v255
    %275 = vmatpush.msra.mxu0 %v254
    %276 = vmatpush.msra.mxu0 %v253
    %277 = vmatpush.msra.mxu0 %v252
    %278 = vmatpush.msra.mxu0 %v251
    %279 = vmatpush.msra.mxu0 %v250
    %280 = vmatpush.msra.mxu0 %v249
    %281 = vmatpush.msra.mxu0 %v248
    %282 = vmatpush.msra.mxu0 %v247
    %283 = vmatmul.f32.gmra.mxu0 %v242
    %v284 = vpop.f32.mrf.mxu0
    %v285 = vadd.f32 %v265, %v284
    %286 = vmatmul.f32.gmra.mxu0 %v245
    %v287 = vpop.f32.mrf.mxu0
    %v288 = vadd.f32 %v265, %v287
    %289 = vdwg.mxu0
    %v290 = vadd.f32 %v285, %v65
    %v291 = vadd.f32 %v288, %v66
    %292 = vst.msk [vmem:[#allocation7] sm:$0xff] %vm75, %v290
    %293 = vst.msk [vmem:[#allocation7 + $0x8] sm:$0xff] %vm75, %v291
    // Predicated region
    $region46: #{tpu_custom_call.1} parent=1 // pred_check
      _
    $region47: #{tpu_custom_call.1} parent=1 // pred_check_branch
      %295 = sbr.rel (0) target = $region49
    $region48: #{tpu_custom_call.1} parent=1 // pred_region
      %297 = vsyncadd [#allocation4], 0
      %s298 = sshll.u32 [#allocation7], 4
      %s299 = int_to_ptr.vmem [resolvable:$true] %s298
      %s300 = sshll.u32 %s9, 4
      %s301 = int_to_ptr.hbm [resolvable:$true] %s300
      %306 = dma.vmem_to_hbm [thread:$0]  %s299, 256, %s301, [#allocation4], 128, 128, 8
    $region49: #{tpu_custom_call.1} parent=1 // pred_fallthru
      _
    // Predicated region
    $region50: #{tpu_custom_call.1} parent=1 // pred_check
      _
    $region51: #{tpu_custom_call.1} parent=1 // pred_check_branch
      %308 = sbr.rel (0) target = $region53
    $region52: #{tpu_custom_call.1} parent=1 // pred_region
      %310 = dma.done [#allocation4], 256
    $region53: #{tpu_custom_call.1} parent=1 // pred_fallthru
      _
    %311 = vsyncpa [#allocation3], 1
    %312 = vsyncpa [#allocation6], 1
    %313 = vsyncpa [#allocation4], 1

// kernel: tpu_custom_call.1
$region0: #{tpu_custom_call.1}
  #allocation0 [shape = 'u32[]', space=smem, size = 0x4, offset = 0x4, fixed_abs, tag = 'smem constant byte address 0x4 - core index']
  #allocation1 [shape = 'u32[72,128]{1,0:T(1,128)}', space=vmem, size = 0x9000, scoped, tag = 'internal scratch']
  %s0 = inlined_call_operand.hbm [shape: f32[16,32], index: 0, kind: input, shape index: {}]
  %s1 = inlined_call_operand.vmem [shape: f32[32,128], index: 1, kind: input, shape index: {}]
  %s2 = inlined_call_operand.vmem [shape: f32[1,128], index: 2, kind: input, shape index: {}]
  %s3 = inlined_call_operand.vmem [shape: f32[128,128], index: 3, kind: input, shape index: {}]
  %s4 = inlined_call_operand.vmem [shape: f32[1,128], index: 4, kind: input, shape index: {}]
  %s5 = inlined_call_operand.hbm [shape: f32[128,128], index: 5, kind: input, shape index: {}]
  %s6 = inlined_call_operand.vmem [shape: f32[1,128], index: 6, kind: input, shape index: {}]
  %s7 = inlined_call_operand.vmem [shape: f32[128,32], index: 7, kind: input, shape index: {}]
  %s8 = inlined_call_operand.vmem [shape: f32[1,32], index: 8, kind: input, shape index: {}]
  %s9 = inlined_call_operand.hbm [shape: f32[16,32], index: 9, kind: output, shape index: {}]
  %s10 = sld [smem:[#allocation0]]
  $region54: #{tpu_custom_call.1} parent=0
    _
  %s12 = ssub.s32 1, %s10
  %s13 = scalar_select 0, %s12, %s10
  $region1: #{tpu_custom_call.1} parent=0
    #allocation2 [shape = 'u8[8192]{0}', space=vmem, size = 0x2000, scoped, tag = 'input window, operand 0, single buffered']
    #allocation3 [shape = 's32[1]{0}', space=sflag, size = 0x4, scoped, tag = 'scoped memory for tpu_custom_call.1']
    #allocation4 [shape = 's32[1]{0}', space=sflag, size = 0x4, scoped, tag = 'scoped memory for tpu_custom_call.1']
    #allocation5 [shape = 'u8[65536]{0}', space=vmem, size = 0x10000, scoped, tag = 'input window, operand 5, single buffered']
    #allocation6 [shape = 's32[1]{0}', space=sflag, size = 0x4, scoped, tag = 'scoped memory for tpu_custom_call.1']
    #allocation7 [shape = 'u8[8192]{0}', space=vmem, size = 0x2000, scoped, tag = 'output window, operand 0, single buffered']
    %14 = vsyncpa [#allocation3], 0
    %15 = vsyncpa [#allocation6], 0
    %16 = vsyncpa [#allocation4], 0
    // Predicated region
    $region2: #{tpu_custom_call.1} parent=1 // pred_check
      _
    $region3: #{tpu_custom_call.1} parent=1 // pred_check_branch
      %18 = sbr.rel (0) target = $region5
    $region4: #{tpu_custom_call.1} parent=1 // pred_region
      %20 = vsyncadd [#allocation3], 0
      %s21 = sshll.u32 %s0, 4
      %s22 = int_to_ptr.hbm [resolvable:$true] %s21
      %s23 = sshll.u32 [#allocation2], 4
      %s24 = int_to_ptr.vmem [resolvable:$true] %s23
      %29 = dma.hbm_to_vmem [thread:$0]  %s22, 256, %s24, [#allocation3], 128, 128, 8
    $region5: #{tpu_custom_call.1} parent=1 // pred_fallthru
      _
    // Predicated region
    $region6: #{tpu_custom_call.1} parent=1 // pred_check
      _
    $region7: #{tpu_custom_call.1} parent=1 // pred_check_branch
      %31 = sbr.rel (0) target = $region9
    $region8: #{tpu_custom_call.1} parent=1 // pred_region
      _
    $region9: #{tpu_custom_call.1} parent=1 // pred_fallthru
      _
    // Predicated region
    $region10: #{tpu_custom_call.1} parent=1 // pred_check
      _
    $region11: #{tpu_custom_call.1} parent=1 // pred_check_branch
      %33 = sbr.rel (0) target = $region13
    $region12: #{tpu_custom_call.1} parent=1 // pred_region
      _
    $region13: #{tpu_custom_call.1} parent=1 // pred_fallthru
      _
    // Predicated region
    $region14: #{tpu_custom_call.1} parent=1 // pred_check
      _
    $region15: #{tpu_custom_call.1} parent=1 // pred_check_branch
      %35 = sbr.rel (0) target = $region17
    $region16: #{tpu_custom_call.1} parent=1 // pred_region
      _
    $region17: #{tpu_custom_call.1} parent=1 // pred_fallthru
      _
    // Predicated region
    $region18: #{tpu_custom_call.1} parent=1 // pred_check
      _
    $region19: #{tpu_custom_call.1} parent=1 // pred_check_branch
      %37 = sbr.rel (0) target = $region21
    $region20: #{tpu_custom_call.1} parent=1 // pred_region
      _
    $region21: #{tpu_custom_call.1} parent=1 // pred_fallthru
      _
    // Predicated region
    $region22: #{tpu_custom_call.1} parent=1 // pred_check
      _
    $region23: #{tpu_custom_call.1} parent=1 // pred_check_branch
      %39 = sbr.rel (0) target = $region25
    $region24: #{tpu_custom_call.1} parent=1 // pred_region
      %41 = vsyncadd [#allocation6], 0
      %s42 = sshll.u32 %s5, 4
      %s43 = int_to_ptr.hbm [resolvable:$true] %s42
      %s44 = sshll.u32 [#allocation5], 4
      %s45 = int_to_ptr.vmem [resolvable:$true] %s44
      %50 = dma.hbm_to_vmem [thread:$0]  %s43, 2048, %s45, [#allocation6], 128, 128, 8
    $region25: #{tpu_custom_call.1} parent=1 // pred_fallthru
      _
    // Predicated region
    $region26: #{tpu_custom_call.1} parent=1 // pred_check
      _
    $region27: #{tpu_custom_call.1} parent=1 // pred_check_branch
      %52 = sbr.rel (0) target = $region29
    $region28: #{tpu_custom_call.1} parent=1 // pred_region
      _
    $region29: #{tpu_custom_call.1} parent=1 // pred_fallthru
      _
    // Predicated region
    $region30: #{tpu_custom_call.1} parent=1 // pred_check
      _
    $region31: #{tpu_custom_call.1} parent=1 // pred_check_branch
      %54 = sbr.rel (0) target = $region33
    $region32: #{tpu_custom_call.1} parent=1 // pred_region
      _
    $region33: #{tpu_custom_call.1} parent=1 // pred_fallthru
      _
    // Predicated region
    $region34: #{tpu_custom_call.1} parent=1 // pred_check
      _
    $region35: #{tpu_custom_call.1} parent=1 // pred_check_branch
      %56 = sbr.rel (0) target = $region37
    $region36: #{tpu_custom_call.1} parent=1 // pred_region
      _
    $region37: #{tpu_custom_call.1} parent=1 // pred_fallthru
      _
    // Predicated region
    $region38: #{tpu_custom_call.1} parent=1 // pred_check
      _
    $region39: #{tpu_custom_call.1} parent=1 // pred_check_branch
      %58 = sbr.rel (0) target = $region41
    $region40: #{tpu_custom_call.1} parent=1 // pred_region
      %60 = dma.done [#allocation3], 256
    $region41: #{tpu_custom_call.1} parent=1 // pred_fallthru
      _
    // Predicated region
    $region42: #{tpu_custom_call.1} parent=1 // pred_check
      _
    $region43: #{tpu_custom_call.1} parent=1 // pred_check_branch
      %62 = sbr.rel (0) target = $region45
    $region44: #{tpu_custom_call.1} parent=1 // pred_region
      %64 = dma.done [#allocation6], 2048
    $region45: #{tpu_custom_call.1} parent=1 // pred_fallthru
      _
    %v65 = vld [vmem:[#allocation2] sm:$0xff]
    %v66 = vld [vmem:[#allocation2 + $0x8] sm:$0xff]
    %v67 = vld [vmem:[%s1] sm:$0xff]
    %v68 = vld [vmem:[%s1 + $0x8] sm:$0xff]
    %v69 = vld [vmem:[%s1 + $0x10] sm:$0xff]
    %v70 = vld [vmem:[%s1 + $0x18] sm:$0xff]
    %v71 = vld [vmem:[%s2] sm:$0x1]
    %v73 = vperm.slane %v71, 0
    %vm75 = vcmask 261120
    %v77 = vsel %vm75, %v65, 0
    %v80 = vsel %vm75, %v66, 0
    %82 = vmatpush.msra.mxu0 0.0
    %83 = vmatpush.msra.mxu0 0.0
    %84 = vmatpush.msra.mxu0 0.0
    %85 = vmatpush.msra.mxu0 0.0
    %86 = vmatpush.msra.mxu0 0.0
    %87 = vmatpush.msra.mxu0 0.0
    %88 = vmatpush.msra.mxu0 0.0
    %89 = vmatpush.msra.mxu0 0.0
    %90 = vmatpush.msra.mxu0 0.0
    %91 = vmatpush.msra.mxu0 0.0
    %92 = vmatpush.msra.mxu0 0.0
    %93 = vmatpush.msra.mxu0 0.0
    %94 = vmatpush.msra.mxu0 %v70
    %95 = vmatpush.msra.mxu0 %v69
    %96 = vmatpush.msra.mxu0 %v68
    %97 = vmatpush.msra.mxu0 %v67
    %98 = vmatmul.f32.gmra.mxu0 %v77
    %v99 = vpop.f32.mrf.mxu0
    %v100 = vadd.f32 %v73, %v99
    %101 = vmatmul.f32.gmra.mxu0 %v80
    %v102 = vpop.f32.mrf.mxu0
    %v103 = vadd.f32 %v73, %v102
    %104 = vdwg.mxu0
    %vm105 = vcmp.gt.f32.partialorder %v100, 20.0
    %vm106 = vcmp.gt.f32.partialorder %v103, 20.0
    %v107 = vsel %vm105, 0.0, %v100
    %v108 = vsel %vm106, 0.0, %v103
    %v109 = vmul.f32 %v107, 1.442695
    %v110 = vpow.pop %v109
    %v111 = vmul.f32 %v108, 1.442695
    %v112 = vpow.pop %v111
    %v113 = vadd.f32 %v110, 1.0
    %v114 = vlog2.pop %v113
    %v115 = vmul.f32 %v114, 0.6931472
    %v116 = vmul.f32 -0.5, %v110
    %v117 = vadd.f32 %v116, 1.0
    %v118 = vmul.f32 %v117, %v110
    %v119 = vand.u32 2147483647, %v110
    %vm120 = vcmp.lt.f32.partialorder %v119, 0.0004427343
    %v121 = vsel %vm120, %v118, %v115
    %v122 = vadd.f32 %v112, 1.0
    %v123 = vlog2.pop %v122
    %v124 = vmul.f32 %v123, 0.6931472
    %v125 = vmul.f32 -0.5, %v112
    %v126 = vadd.f32 %v125, 1.0
    %v127 = vmul.f32 %v126, %v112
    %v128 = vand.u32 2147483647, %v112
    %vm129 = vcmp.lt.f32.partialorder %v128, 0.0004427343
    %v130 = vsel %vm129, %v127, %v124
    %v131 = vsel %vm105, %v100, %v121
    %v132 = vsel %vm106, %v103, %v130
    %v133 = vld [vmem:[%s3] sm:$0xff]
    %v134 = vld [vmem:[%s3 + $0x8] sm:$0xff]
    %v135 = vld [vmem:[%s3 + $0x10] sm:$0xff]
    %v136 = vld [vmem:[%s3 + $0x18] sm:$0xff]
    %v137 = vld [vmem:[%s3 + $0x20] sm:$0xff]
    %v138 = vld [vmem:[%s3 + $0x28] sm:$0xff]
    %v139 = vld [vmem:[%s3 + $0x30] sm:$0xff]
    %v140 = vld [vmem:[%s3 + $0x38] sm:$0xff]
    %v141 = vld [vmem:[%s3 + $0x40] sm:$0xff]
    %v142 = vld [vmem:[%s3 + $0x48] sm:$0xff]
    %v143 = vld [vmem:[%s3 + $0x50] sm:$0xff]
    %v144 = vld [vmem:[%s3 + $0x58] sm:$0xff]
    %v145 = vld [vmem:[%s3 + $0x60] sm:$0xff]
    %v146 = vld [vmem:[%s3 + $0x68] sm:$0xff]
    %v147 = vld [vmem:[%s3 + $0x70] sm:$0xff]
    %v148 = vld [vmem:[%s3 + $0x78] sm:$0xff]
    %v149 = vld [vmem:[%s4] sm:$0x1]
    %v151 = vperm.slane %v149, 0
    %153 = vmatpush.msra.mxu0 %v148
    %154 = vmatpush.msra.mxu0 %v147
    %155 = vmatpush.msra.mxu0 %v146
    %156 = vmatpush.msra.mxu0 %v145
    %157 = vmatpush.msra.mxu0 %v144
    %158 = vmatpush.msra.mxu0 %v143
    %159 = vmatpush.msra.mxu0 %v142
    %160 = vmatpush.msra.mxu0 %v141
    %161 = vmatpush.msra.mxu0 %v140
    %162 = vmatpush.msra.mxu0 %v139
    %163 = vmatpush.msra.mxu0 %v138
    %164 = vmatpush.msra.mxu0 %v137
    %165 = vmatpush.msra.mxu0 %v136
    %166 = vmatpush.msra.mxu0 %v135
    %167 = vmatpush.msra.mxu0 %v134
    %168 = vmatpush.msra.mxu0 %v133
    %169 = vmatmul.f32.gmra.mxu0 %v131
    %v170 = vpop.f32.mrf.mxu0
    %v171 = vadd.f32 %v151, %v170
    %172 = vmatmul.f32.gmra.mxu0 %v132
    %v173 = vpop.f32.mrf.mxu0
    %v174 = vadd.f32 %v151, %v173
    %175 = vdwg.mxu0
    %vm176 = vcmp.gt.f32.partialorder %v171, 20.0
    %vm177 = vcmp.gt.f32.partialorder %v174, 20.0
    %v178 = vsel %vm176, 0.0, %v171
    %v179 = vsel %vm177, 0.0, %v174
    %v180 = vmul.f32 %v178, 1.442695
    %v181 = vpow.pop %v180
    %v182 = vmul.f32 %v179, 1.442695
    %v183 = vpow.pop %v182
    %v184 = vadd.f32 %v181, 1.0
    %v185 = vlog2.pop %v184
    %v186 = vmul.f32 %v185, 0.6931472
    %v187 = vmul.f32 -0.5, %v181
    %v188 = vadd.f32 %v187, 1.0
    %v189 = vmul.f32 %v188, %v181
    %v190 = vand.u32 2147483647, %v181
    %vm191 = vcmp.lt.f32.partialorder %v190, 0.0004427343
    %v192 = vsel %vm191, %v189, %v186
    %v193 = vadd.f32 %v183, 1.0
    %v194 = vlog2.pop %v193
    %v195 = vmul.f32 %v194, 0.6931472
    %v196 = vmul.f32 -0.5, %v183
    %v197 = vadd.f32 %v196, 1.0
    %v198 = vmul.f32 %v197, %v183
    %v199 = vand.u32 2147483647, %v183
    %vm200 = vcmp.lt.f32.partialorder %v199, 0.0004427343
    %v201 = vsel %vm200, %v198, %v195
    %v202 = vsel %vm176, %v171, %v192
    %v203 = vsel %vm177, %v174, %v201
    %v204 = vld [vmem:[#allocation5] sm:$0xff]
    %v205 = vld [vmem:[#allocation5 + $0x8] sm:$0xff]
    %v206 = vld [vmem:[#allocation5 + $0x10] sm:$0xff]
    %v207 = vld [vmem:[#allocation5 + $0x18] sm:$0xff]
    %v208 = vld [vmem:[#allocation5 + $0x20] sm:$0xff]
    %v209 = vld [vmem:[#allocation5 + $0x28] sm:$0xff]
    %v210 = vld [vmem:[#allocation5 + $0x30] sm:$0xff]
    %v211 = vld [vmem:[#allocation5 + $0x38] sm:$0xff]
    %v212 = vld [vmem:[#allocation5 + $0x40] sm:$0xff]
    %v213 = vld [vmem:[#allocation5 + $0x48] sm:$0xff]
    %v214 = vld [vmem:[#allocation5 + $0x50] sm:$0xff]
    %v215 = vld [vmem:[#allocation5 + $0x58] sm:$0xff]
    %v216 = vld [vmem:[#allocation5 + $0x60] sm:$0xff]
    %v217 = vld [vmem:[#allocation5 + $0x68] sm:$0xff]
    %v218 = vld [vmem:[#allocation5 + $0x70] sm:$0xff]
    %v219 = vld [vmem:[#allocation5 + $0x78] sm:$0xff]
    %v220 = vld [vmem:[%s6] sm:$0x1]
    %v222 = vperm.slane %v220, 0
    %224 = vmatpush.msra.mxu0 %v219
    %225 = vmatpush.msra.mxu0 %v218
    %226 = vmatpush.msra.mxu0 %v217
    %227 = vmatpush.msra.mxu0 %v216
    %228 = vmatpush.msra.mxu0 %v215
    %229 = vmatpush.msra.mxu0 %v214
    %230 = vmatpush.msra.mxu0 %v213
    %231 = vmatpush.msra.mxu0 %v212
    %232 = vmatpush.msra.mxu0 %v211
    %233 = vmatpush.msra.mxu0 %v210
    %234 = vmatpush.msra.mxu0 %v209
    %235 = vmatpush.msra.mxu0 %v208
    %236 = vmatpush.msra.mxu0 %v207
    %237 = vmatpush.msra.mxu0 %v206
    %238 = vmatpush.msra.mxu0 %v205
    %239 = vmatpush.msra.mxu0 %v204
    %240 = vmatmul.f32.gmra.mxu0 %v202
    %v241 = vpop.f32.mrf.mxu0
    %v242 = vadd.f32 %v222, %v241
    %243 = vmatmul.f32.gmra.mxu0 %v203
    %v244 = vpop.f32.mrf.mxu0
    %v245 = vadd.f32 %v222, %v244
    %246 = vdwg.mxu0
    %v247 = vld [vmem:[%s7] sm:$0xff]
    %v248 = vld [vmem:[%s7 + $0x8] sm:$0xff]
    %v249 = vld [vmem:[%s7 + $0x10] sm:$0xff]
    %v250 = vld [vmem:[%s7 + $0x18] sm:$0xff]
    %v251 = vld [vmem:[%s7 + $0x20] sm:$0xff]
    %v252 = vld [vmem:[%s7 + $0x28] sm:$0xff]
    %v253 = vld [vmem:[%s7 + $0x30] sm:$0xff]
    %v254 = vld [vmem:[%s7 + $0x38] sm:$0xff]
    %v255 = vld [vmem:[%s7 + $0x40] sm:$0xff]
    %v256 = vld [vmem:[%s7 + $0x48] sm:$0xff]
    %v257 = vld [vmem:[%s7 + $0x50] sm:$0xff]
    %v258 = vld [vmem:[%s7 + $0x58] sm:$0xff]
    %v259 = vld [vmem:[%s7 + $0x60] sm:$0xff]
    %v260 = vld [vmem:[%s7 + $0x68] sm:$0xff]
    %v261 = vld [vmem:[%s7 + $0x70] sm:$0xff]
    %v262 = vld [vmem:[%s7 + $0x78] sm:$0xff]
    %v263 = vld [vmem:[%s8] sm:$0x1]
    %v265 = vperm.slane %v263, 0
    %267 = vmatpush.msra.mxu0 %v262
    %268 = vmatpush.msra.mxu0 %v261
    %269 = vmatpush.msra.mxu0 %v260
    %270 = vmatpush.msra.mxu0 %v259
    %271 = vmatpush.msra.mxu0 %v258
    %272 = vmatpush.msra.mxu0 %v257
    %273 = vmatpush.msra.mxu0 %v256
    %274 = vmatpush.msra.mxu0 %v255
    %275 = vmatpush.msra.mxu0 %v254
    %276 = vmatpush.msra.mxu0 %v253
    %277 = vmatpush.msra.mxu0 %v252
    %278 = vmatpush.msra.mxu0 %v251
    %279 = vmatpush.msra.mxu0 %v250
    %280 = vmatpush.msra.mxu0 %v249
    %281 = vmatpush.msra.mxu0 %v248
    %282 = vmatpush.msra.mxu0 %v247
    %283 = vmatmul.f32.gmra.mxu0 %v242
    %v284 = vpop.f32.mrf.mxu0
    %v285 = vadd.f32 %v265, %v284
    %286 = vmatmul.f32.gmra.mxu0 %v245
    %v287 = vpop.f32.mrf.mxu0
    %v288 = vadd.f32 %v265, %v287
    %289 = vdwg.mxu0
    %v290 = vadd.f32 %v285, %v65
    %v291 = vadd.f32 %v288, %v66
    %292 = vst.msk [vmem:[#allocation7] sm:$0xff] %vm75, %v290
    %293 = vst.msk [vmem:[#allocation7 + $0x8] sm:$0xff] %vm75, %v291
    // Predicated region
    $region46: #{tpu_custom_call.1} parent=1 // pred_check
      _
    $region47: #{tpu_custom_call.1} parent=1 // pred_check_branch
      %295 = sbr.rel (0) target = $region49
    $region48: #{tpu_custom_call.1} parent=1 // pred_region
      %297 = vsyncadd [#allocation4], 0
      %s298 = sshll.u32 [#allocation7], 4
      %s299 = int_to_ptr.vmem [resolvable:$true] %s298
      %s300 = sshll.u32 %s9, 4
      %s301 = int_to_ptr.hbm [resolvable:$true] %s300
      %306 = dma.vmem_to_hbm [thread:$0]  %s299, 256, %s301, [#allocation4], 128, 128, 8
    $region49: #{tpu_custom_call.1} parent=1 // pred_fallthru
      _
    // Predicated region
    $region50: #{tpu_custom_call.1} parent=1 // pred_check
      _
    $region51: #{tpu_custom_call.1} parent=1 // pred_check_branch
      %308 = sbr.rel (0) target = $region53
    $region52: #{tpu_custom_call.1} parent=1 // pred_region
      %310 = dma.done [#allocation4], 256
    $region53: #{tpu_custom_call.1} parent=1 // pred_fallthru
      _
    %311 = vsyncpa [#allocation3], 1
    %312 = vsyncpa [#allocation6], 1
    %313 = vsyncpa [#allocation4], 1

</llo_original>
